<compile_context>
chip_gen: v7x
topology: tpu7x:2x2x1
jax: 0.10.0
libtpu: 0.0.40
codegen_flags: <defaults>
</compile_context>

<pallas_src>
import jax
import jax.numpy as jnp
from jax.experimental import pallas as pl
from jax.experimental.pallas import tpu as pltpu


def _round_up(x, m):
    return ((x + m - 1) // m) * m


def nin_kernel(x_ref, w1_ref, t1_ref, w2_ref, t2_ref, w3_ref, t3_ref, o_ref):
    """One M-tile of: (im2col conv1 -> BN -> ReLU) -> (1x1 -> BN -> ReLU) x 2.

    BN scale is pre-folded into the weight columns, so the epilogue is only
    add + ReLU, always computed in f32 (v5e VPU has no bf16 path).
    """
    mm_dtype = w1_ref.dtype
    # Hoist the per-channel shift broadcasts once.
    t1 = t1_ref[...]
    t2 = t2_ref[...]
    t3 = t3_ref[...]

    h = jnp.dot(x_ref[...], w1_ref[...], preferred_element_type=jnp.float32)
    h = jnp.maximum(h + t1, 0.0)
    h = jnp.dot(h.astype(mm_dtype), w2_ref[...], preferred_element_type=jnp.float32)
    h = jnp.maximum(h + t2, 0.0)
    h = jnp.dot(h.astype(mm_dtype), w3_ref[...], preferred_element_type=jnp.float32)
    h = jnp.maximum(h + t3, 0.0)
    o_ref[...] = h.astype(o_ref.dtype)


def _fold_bn(bias, gamma, beta, mean, var, eps=1e-5):
    """Fold conv bias + inference BatchNorm into per-channel scale/shift."""
    scale = gamma / jnp.sqrt(var + eps)          # (P,)
    shift = (bias - mean) * scale + beta         # (P,)
    return scale, shift


def _im2col_3x3_s2_p1(x_nchw):
    """x: (N, C, H, W) -> patches (N*Ho*Wo, 9*C) ordered (kh, kw, c)."""
    n, c, h, w = x_nchw.shape
    ho, wo = (h + 2 - 3) // 2 + 1, (w + 2 - 3) // 2 + 1
    x = jnp.transpose(x_nchw, (0, 2, 3, 1))                       # NHWC
    x = jnp.pad(x, ((0, 0), (1, 1), (1, 1), (0, 0)))
    cols = []
    for kh in range(3):
        for kw in range(3):
            cols.append(x[:, kh:kh + 2 * ho:2, kw:kw + 2 * wo:2, :])   # (N,Ho,Wo,C)
    patches = jnp.concatenate(cols, axis=-1)                      # (N,Ho,Wo,9*C)
    return patches.reshape(n * ho * wo, 9 * c), (n, ho, wo)


def _choose_tm(m_rows, k_pad, p_pad, mm_bytes):
    """Pick the row-tile size against a ~24 MiB activation budget (v7x-safe)."""
    budget = 24 * 1024 * 1024
    per_row = (2 * k_pad * mm_bytes        # double-buffered input tile
               + 2 * p_pad * 4             # double-buffered f32 output tile
               + 3 * p_pad * 4)            # f32 intermediates live in the chain
    tm = max(128, min(1024, ((budget // per_row) // 128) * 128))
    return min(tm, _round_up(m_rows, 128))


def nin_block_forward(x, params, compute_dtype=jnp.float32):
    """x: (N, C_in, H, W) float32 NCHW.  Returns (N, planes, H_out, W_out)."""
    (w1, b1, g1, be1, m1, v1,
     w2, b2, g2, be2, m2, v2,
     w3, b3, g3, be3, m3, v3) = params
    planes = w1.shape[0]

    patches, (n, ho, wo) = _im2col_3x3_s2_p1(x)                   # (M, 9*Cin)
    m, k = patches.shape

    # Fold conv bias + eval-mode BatchNorm into per-channel scale/shift, then
    # fold the scale into the weight columns:  x @ (W*s) + t == (x @ W)*s + t.
    s1, t1 = _fold_bn(b1, g1, be1, m1, v1)
    s2, t2 = _fold_bn(b2, g2, be2, m2, v2)
    s3, t3 = _fold_bn(b3, g3, be3, m3, v3)

    # conv1 weight (P, Cin, 3, 3) -> (9*Cin, P) in (kh, kw, cin) order.
    w1_mat = jnp.transpose(w1, (2, 3, 1, 0)).reshape(k, planes) * s1[None, :]
    w2_mat = w2.reshape(planes, planes).T * s2[None, :]           # (P_in, P_out)
    w3_mat = w3.reshape(planes, planes).T * s3[None, :]

    # Pad channel dims to the 128-lane width -> lane-dense matmuls & unmasked stores.
    k_pad = _round_up(k, 128)
    p_pad = _round_up(planes, 128)

    mm_bytes = jnp.dtype(compute_dtype).itemsize
    tm = _choose_tm(m, k_pad, p_pad, mm_bytes)
    m_pad = _round_up(m, tm)

    x_p = jnp.pad(patches.astype(compute_dtype),
                  ((0, m_pad - m), (0, k_pad - k)))
    w1_p = jnp.pad(w1_mat.astype(compute_dtype),
                   ((0, k_pad - k), (0, p_pad - planes)))
    w2_p = jnp.pad(w2_mat.astype(compute_dtype),
                   ((0, p_pad - planes), (0, p_pad - planes)))
    w3_p = jnp.pad(w3_mat.astype(compute_dtype),
                   ((0, p_pad - planes), (0, p_pad - planes)))
    t1_p = jnp.pad(t1.astype(jnp.float32), (0, p_pad - planes)).reshape(1, p_pad)
    t2_p = jnp.pad(t2.astype(jnp.float32), (0, p_pad - planes)).reshape(1, p_pad)
    t3_p = jnp.pad(t3.astype(jnp.float32), (0, p_pad - planes)).reshape(1, p_pad)

    flops = 2 * m * planes * (k + 2 * planes)
    bytes_accessed = (m_pad * k_pad * mm_bytes + m_pad * p_pad * 4
                      + (k_pad + 2 * p_pad) * p_pad * mm_bytes + 3 * p_pad * 4)

    out = pl.pallas_call(
        nin_kernel,
        out_shape=jax.ShapeDtypeStruct((m_pad, p_pad), jnp.float32),
        grid=(m_pad // tm,),
        in_specs=[
            pl.BlockSpec((tm, k_pad), lambda i: (i, 0)),      # stream activations
            pl.BlockSpec((k_pad, p_pad), lambda i: (0, 0)),   # weights stay resident
            pl.BlockSpec((1, p_pad), lambda i: (0, 0)),
            pl.BlockSpec((p_pad, p_pad), lambda i: (0, 0)),
            pl.BlockSpec((1, p_pad), lambda i: (0, 0)),
            pl.BlockSpec((p_pad, p_pad), lambda i: (0, 0)),
            pl.BlockSpec((1, p_pad), lambda i: (0, 0)),
        ],
        out_specs=pl.BlockSpec((tm, p_pad), lambda i: (i, 0)),
        compiler_params=pltpu.CompilerParams(
            dimension_semantics=("parallel",),                # v7x: 2 TCs split M
            vmem_limit_bytes=48 * 1024 * 1024),
        cost_estimate=pl.CostEstimate(flops=int(flops), transcendentals=0,
                                      bytes_accessed=int(bytes_accessed)),
    )(x_p, w1_p, t1_p, w2_p, t2_p, w3_p, t3_p)

    out = out[:m, :planes]
    # (M, P) -> (N, Ho, Wo, P) -> NCHW
    return jnp.transpose(out.reshape(n, ho, wo, planes), (0, 3, 1, 2))


def nin_block_reference(x, params):
    """Pure-JAX reference (lax.conv) for correctness checking."""
    (w1, b1, g1, be1, m1, v1,
     w2, b2, g2, be2, m2, v2,
     w3, b3, g3, be3, m3, v3) = params
    eps = 1e-5

    def bn_relu(y, b, g, be, mu, var):
        y = y + b[None, :, None, None]
        y = (y - mu[None, :, None, None]) / jnp.sqrt(var[None, :, None, None] + eps)
        y = y * g[None, :, None, None] + be[None, :, None, None]
        return jnp.maximum(y, 0.0)

    dn = jax.lax.conv_dimension_numbers(x.shape, w1.shape, ("NCHW", "OIHW", "NCHW"))
    y = jax.lax.conv_general_dilated(x, w1, (2, 2), ((1, 1), (1, 1)), dimension_numbers=dn)
    y = bn_relu(y, b1, g1, be1, m1, v1)
    y = jax.lax.conv_general_dilated(y, w2, (1, 1), ((0, 0), (0, 0)), dimension_numbers=dn)
    y = bn_relu(y, b2, g2, be2, m2, v2)
    y = jax.lax.conv_general_dilated(y, w3, (1, 1), ((0, 0), (0, 0)), dimension_numbers=dn)
    y = bn_relu(y, b3, g3, be3, m3, v3)
    return y


def init_params(key, inplanes, planes):
    ks = jax.random.split(key, 12)
    w1 = 0.1 * jax.random.normal(ks[0], (planes, inplanes, 3, 3), jnp.float32)
    b1 = 0.1 * jax.random.normal(ks[1], (planes,), jnp.float32)
    w2 = 0.1 * jax.random.normal(ks[2], (planes, planes, 1, 1), jnp.float32)
    b2 = 0.1 * jax.random.normal(ks[3], (planes,), jnp.float32)
    w3 = 0.1 * jax.random.normal(ks[4], (planes, planes, 1, 1), jnp.float32)
    b3 = 0.1 * jax.random.normal(ks[5], (planes,), jnp.float32)

    def bn(kg, kb):
        gamma = 1.0 + 0.1 * jax.random.normal(kg, (planes,), jnp.float32)
        beta = 0.1 * jax.random.normal(kb, (planes,), jnp.float32)
        mean = 0.05 * jax.random.normal(kg, (planes,), jnp.float32)
        var = 1.0 + 0.1 * jnp.abs(jax.random.normal(kb, (planes,), jnp.float32))
        return gamma, beta, mean, var

    g1, be1, m1, v1 = bn(ks[6], ks[7])
    g2, be2, m2, v2 = bn(ks[8], ks[9])
    g3, be3, m3, v3 = bn(ks[10], ks[11])
    return (w1, b1, g1, be1, m1, v1,
            w2, b2, g2, be2, m2, v2,
            w3, b3, g3, be3, m3, v3)


if __name__ == "__main__":
    key = jax.random.PRNGKey(0)
    kx, kp = jax.random.split(key)

    N, C_IN, H, W = 2, 4, 16, 16
    PLANES = 8

    x = jax.random.normal(kx, (N, C_IN, H, W), jnp.float32)
    params = init_params(kp, C_IN, PLANES)

    fwd = jax.jit(nin_block_forward, static_argnames="compute_dtype")
    ref = jax.block_until_ready(nin_block_reference(x, params))

    # f32 matmul path: tight tolerance (v5e-friendly default).
    out_f32 = jax.block_until_ready(fwd(x, params, compute_dtype=jnp.float32))
    assert out_f32.shape == (N, PLANES, H // 2, W // 2), out_f32.shape
    assert jnp.allclose(out_f32, ref, atol=1e-4, rtol=1e-4), "f32 mismatch vs reference"

    # bf16 matmul path (v6e/v7x MXU-native, halves HBM traffic): loose tolerance.
    out_bf16 = jax.block_until_ready(fwd(x, params, compute_dtype=jnp.bfloat16))
    assert out_bf16.shape == (N, PLANES, H // 2, W // 2), out_bf16.shape
    assert jnp.allclose(out_bf16, ref, atol=3e-2, rtol=3e-2), "bf16 mismatch vs reference"

    print("KERNEL_OK")
</pallas_src>

<mosaic_0001>
module attributes {stable_mosaic.version = 11 : i64} {
  func.func @nin_kernel(%arg0: i32, %arg1: memref<128x128xf32, #tpu.memory_space<vmem>>, %arg2: memref<128x128xf32, #tpu.memory_space<vmem>>, %arg3: memref<1x128xf32, #tpu.memory_space<vmem>>, %arg4: memref<128x128xf32, #tpu.memory_space<vmem>>, %arg5: memref<1x128xf32, #tpu.memory_space<vmem>>, %arg6: memref<128x128xf32, #tpu.memory_space<vmem>>, %arg7: memref<1x128xf32, #tpu.memory_space<vmem>>, %arg8: memref<128x128xf32, #tpu.memory_space<vmem>>) attributes {dimension_semantics = [#tpu.dimension_semantics<parallel>], iteration_bounds = array<i64: 1>, scalar_prefetch = 0 : i64, scratch_operands = 0 : i64, tpu.core_type = #tpu.core_type<tc>, window_params = [{transform_indices = @transform_0, window_bounds = array<i64: 128, 128>}, {pipeline_mode = #tpu.pipeline_mode<synchronous>, transform_indices = @transform_1, window_bounds = array<i64: 128, 128>}, {pipeline_mode = #tpu.pipeline_mode<synchronous>, transform_indices = @transform_2, window_bounds = array<i64: 1, 128>}, {pipeline_mode = #tpu.pipeline_mode<synchronous>, transform_indices = @transform_3, window_bounds = array<i64: 128, 128>}, {pipeline_mode = #tpu.pipeline_mode<synchronous>, transform_indices = @transform_4, window_bounds = array<i64: 1, 128>}, {pipeline_mode = #tpu.pipeline_mode<synchronous>, transform_indices = @transform_5, window_bounds = array<i64: 128, 128>}, {pipeline_mode = #tpu.pipeline_mode<synchronous>, transform_indices = @transform_6, window_bounds = array<i64: 1, 128>}, {transform_indices = @transform_7, window_bounds = array<i64: 128, 128>}]} {
    %c0 = arith.constant 0 : index
    %c0_0 = arith.constant 0 : index
    %0 = vector.load %arg3[%c0, %c0_0] : memref<1x128xf32, #tpu.memory_space<vmem>>, vector<1x128xf32>
    %c0_1 = arith.constant 0 : index
    %c0_2 = arith.constant 0 : index
    %1 = vector.load %arg5[%c0_1, %c0_2] : memref<1x128xf32, #tpu.memory_space<vmem>>, vector<1x128xf32>
    %c0_3 = arith.constant 0 : index
    %c0_4 = arith.constant 0 : index
    %2 = vector.load %arg7[%c0_3, %c0_4] : memref<1x128xf32, #tpu.memory_space<vmem>>, vector<1x128xf32>
    %c0_5 = arith.constant 0 : index
    %c0_6 = arith.constant 0 : index
    %3 = vector.load %arg1[%c0_5, %c0_6] : memref<128x128xf32, #tpu.memory_space<vmem>>, vector<128x128xf32>
    %c0_7 = arith.constant 0 : index
    %c0_8 = arith.constant 0 : index
    %4 = vector.load %arg2[%c0_7, %c0_8] : memref<128x128xf32, #tpu.memory_space<vmem>>, vector<128x128xf32>
    %cst = arith.constant dense<0.000000e+00> : vector<128x128xf32>
    %5 = tpu.matmul %3, %4, %cst {dimension_numbers = #tpu.dot_dimension_numbers<[1], [0], [0], [1], [0, 0, 1, 1], [], []>} : vector<128x128xf32>, vector<128x128xf32>, vector<128x128xf32> -> vector<128x128xf32>
    %6 = vector.broadcast %0 : vector<1x128xf32> to vector<128x128xf32>
    %7 = arith.addf %5, %6 : vector<128x128xf32>
    %cst_9 = arith.constant 0.000000e+00 : f32
    %8 = vector.broadcast %cst_9 : f32 to vector<128x128xf32>
    %9 = arith.maximumf %7, %8 : vector<128x128xf32>
    %c0_10 = arith.constant 0 : index
    %c0_11 = arith.constant 0 : index
    %10 = vector.load %arg4[%c0_10, %c0_11] : memref<128x128xf32, #tpu.memory_space<vmem>>, vector<128x128xf32>
    %cst_12 = arith.constant dense<0.000000e+00> : vector<128x128xf32>
    %11 = tpu.matmul %9, %10, %cst_12 {dimension_numbers = #tpu.dot_dimension_numbers<[1], [0], [0], [1], [0, 0, 1, 1], [], []>} : vector<128x128xf32>, vector<128x128xf32>, vector<128x128xf32> -> vector<128x128xf32>
    %12 = vector.broadcast %1 : vector<1x128xf32> to vector<128x128xf32>
    %13 = arith.addf %11, %12 : vector<128x128xf32>
    %cst_13 = arith.constant 0.000000e+00 : f32
    %14 = vector.broadcast %cst_13 : f32 to vector<128x128xf32>
    %15 = arith.maximumf %13, %14 : vector<128x128xf32>
    %c0_14 = arith.constant 0 : index
    %c0_15 = arith.constant 0 : index
    %16 = vector.load %arg6[%c0_14, %c0_15] : memref<128x128xf32, #tpu.memory_space<vmem>>, vector<128x128xf32>
    %cst_16 = arith.constant dense<0.000000e+00> : vector<128x128xf32>
    %17 = tpu.matmul %15, %16, %cst_16 {dimension_numbers = #tpu.dot_dimension_numbers<[1], [0], [0], [1], [0, 0, 1, 1], [], []>} : vector<128x128xf32>, vector<128x128xf32>, vector<128x128xf32> -> vector<128x128xf32>
    %18 = vector.broadcast %2 : vector<1x128xf32> to vector<128x128xf32>
    %19 = arith.addf %17, %18 : vector<128x128xf32>
    %cst_17 = arith.constant 0.000000e+00 : f32
    %20 = vector.broadcast %cst_17 : f32 to vector<128x128xf32>
    %21 = arith.maximumf %19, %20 : vector<128x128xf32>
    %c0_18 = arith.constant 0 : index
    %c0_19 = arith.constant 0 : index
    %22 = vector.load %arg8[%c0_18, %c0_19] : memref<128x128xf32, #tpu.memory_space<vmem>>, vector<128x128xf32>
    tpu.vector_store %arg8[%c0_18, %c0_19], %21 {strides = array<i32>} : memref<128x128xf32, #tpu.memory_space<vmem>>, vector<128x128xf32>,
    return
  }
  func.func @transform_0(%arg0: i32) -> (i32, i32) {
    %c0_i32 = arith.constant 0 : i32
    %c0_i32_0 = arith.constant 0 : i32
    return %arg0, %c0_i32 : i32, i32
  }
  func.func @transform_1(%arg0: i32) -> (i32, i32) {
    %c0_i32 = arith.constant 0 : i32
    %c0_i32_0 = arith.constant 0 : i32
    %c0_i32_1 = arith.constant 0 : i32
    return %c0_i32, %c0_i32_0 : i32, i32
  }
  func.func @transform_2(%arg0: i32) -> (i32, i32) {
    %c0_i32 = arith.constant 0 : i32
    %c0_i32_0 = arith.constant 0 : i32
    %c0_i32_1 = arith.constant 0 : i32
    return %c0_i32, %c0_i32_0 : i32, i32
  }
  func.func @transform_3(%arg0: i32) -> (i32, i32) {
    %c0_i32 = arith.constant 0 : i32
    %c0_i32_0 = arith.constant 0 : i32
    %c0_i32_1 = arith.constant 0 : i32
    return %c0_i32, %c0_i32_0 : i32, i32
  }
  func.func @transform_4(%arg0: i32) -> (i32, i32) {
    %c0_i32 = arith.constant 0 : i32
    %c0_i32_0 = arith.constant 0 : i32
    %c0_i32_1 = arith.constant 0 : i32
    return %c0_i32, %c0_i32_0 : i32, i32
  }
  func.func @transform_5(%arg0: i32) -> (i32, i32) {
    %c0_i32 = arith.constant 0 : i32
    %c0_i32_0 = arith.constant 0 : i32
    %c0_i32_1 = arith.constant 0 : i32
    return %c0_i32, %c0_i32_0 : i32, i32
  }
  func.func @transform_6(%arg0: i32) -> (i32, i32) {
    %c0_i32 = arith.constant 0 : i32
    %c0_i32_0 = arith.constant 0 : i32
    %c0_i32_1 = arith.constant 0 : i32
    return %c0_i32, %c0_i32_0 : i32, i32
  }
  func.func @transform_7(%arg0: i32) -> (i32, i32) {
    %c0_i32 = arith.constant 0 : i32
    %c0_i32_0 = arith.constant 0 : i32
    return %arg0, %c0_i32 : i32, i32
  }
}

</mosaic_0001>

<llo_original>
// kernel: nin_block_forward.1
$region0: #{nin_block_forward.1}
  #allocation0 [shape = 'u32[]', space=smem, size = 0x4, offset = 0x4, fixed_abs, tag = 'smem constant byte address 0x4 - core index']
  #allocation1 [shape = 'u32[144,128]{1,0:T(1,128)}', space=vmem, size = 0x12000, scoped, tag = 'internal scratch']
  %s0 = inlined_call_operand.vmem [shape: f32[128,128], index: 0, kind: input, shape index: {}]
  %s1 = inlined_call_operand.vmem [shape: f32[128,128], index: 1, kind: input, shape index: {}]
  %s2 = inlined_call_operand.vmem [shape: f32[1,128], index: 2, kind: input, shape index: {}]
  %s3 = inlined_call_operand.vmem [shape: f32[128,128], index: 3, kind: input, shape index: {}]
  %s4 = inlined_call_operand.vmem [shape: f32[1,128], index: 4, kind: input, shape index: {}]
  %s5 = inlined_call_operand.vmem [shape: f32[128,128], index: 5, kind: input, shape index: {}]
  %s6 = inlined_call_operand.vmem [shape: f32[1,128], index: 6, kind: input, shape index: {}]
  %s7 = inlined_call_operand.vmem [shape: f32[128,128], index: 7, kind: output, shape index: {}]
  %s8 = sld [smem:[#allocation0]]
  $region38: #{nin_block_forward.1} parent=0
    _
  %s10 = ssub.s32 1, %s8
  %s11 = scalar_select 0, %s10, %s8
  // Predicated region
  $region2: #{nin_block_forward.1} parent=0 // pred_check
    _
  $region3: #{nin_block_forward.1} parent=0 // pred_check_branch
    %13 = sbr.rel (0) target = $region5
  $region4: #{nin_block_forward.1} parent=0 // pred_region
    _
  $region5: #{nin_block_forward.1} parent=0 // pred_fallthru
    _
  // Predicated region
  $region6: #{nin_block_forward.1} parent=0 // pred_check
    _
  $region7: #{nin_block_forward.1} parent=0 // pred_check_branch
    %15 = sbr.rel (0) target = $region9
  $region8: #{nin_block_forward.1} parent=0 // pred_region
    _
  $region9: #{nin_block_forward.1} parent=0 // pred_fallthru
    _
  // Predicated region
  $region10: #{nin_block_forward.1} parent=0 // pred_check
    _
  $region11: #{nin_block_forward.1} parent=0 // pred_check_branch
    %17 = sbr.rel (0) target = $region13
  $region12: #{nin_block_forward.1} parent=0 // pred_region
    _
  $region13: #{nin_block_forward.1} parent=0 // pred_fallthru
    _
  // Predicated region
  $region14: #{nin_block_forward.1} parent=0 // pred_check
    _
  $region15: #{nin_block_forward.1} parent=0 // pred_check_branch
    %19 = sbr.rel (0) target = $region17
  $region16: #{nin_block_forward.1} parent=0 // pred_region
    _
  $region17: #{nin_block_forward.1} parent=0 // pred_fallthru
    _
  // Predicated region
  $region18: #{nin_block_forward.1} parent=0 // pred_check
    _
  $region19: #{nin_block_forward.1} parent=0 // pred_check_branch
    %21 = sbr.rel (0) target = $region21
  $region20: #{nin_block_forward.1} parent=0 // pred_region
    _
  $region21: #{nin_block_forward.1} parent=0 // pred_fallthru
    _
  // Predicated region
  $region22: #{nin_block_forward.1} parent=0 // pred_check
    _
  $region23: #{nin_block_forward.1} parent=0 // pred_check_branch
    %23 = sbr.rel (0) target = $region25
  $region24: #{nin_block_forward.1} parent=0 // pred_region
    _
  $region25: #{nin_block_forward.1} parent=0 // pred_fallthru
    _
  // Predicated region
  $region26: #{nin_block_forward.1} parent=0 // pred_check
    _
  $region27: #{nin_block_forward.1} parent=0 // pred_check_branch
    %25 = sbr.rel (0) target = $region29
  $region28: #{nin_block_forward.1} parent=0 // pred_region
    _
  $region29: #{nin_block_forward.1} parent=0 // pred_fallthru
    _
  %v26 = vld [vmem:[%s2] sm:$0x1]
  %v27 = vld [vmem:[%s4] sm:$0x1]
  %v28 = vld [vmem:[%s6] sm:$0x1]
  %v29 = vld [vmem:[%s0] sm:$0xff]
  %v30 = vld [vmem:[%s0 + $0x8] sm:$0xff]
  %v31 = vld [vmem:[%s0 + $0x10] sm:$0xff]
  %v32 = vld [vmem:[%s0 + $0x18] sm:$0xff]
  %v33 = vld [vmem:[%s0 + $0x20] sm:$0xff]
  %v34 = vld [vmem:[%s0 + $0x28] sm:$0xff]
  %v35 = vld [vmem:[%s0 + $0x30] sm:$0xff]
  %v36 = vld [vmem:[%s0 + $0x38] sm:$0xff]
  %v37 = vld [vmem:[%s0 + $0x40] sm:$0xff]
  %v38 = vld [vmem:[%s0 + $0x48] sm:$0xff]
  %v39 = vld [vmem:[%s0 + $0x50] sm:$0xff]
  %v40 = vld [vmem:[%s0 + $0x58] sm:$0xff]
  %v41 = vld [vmem:[%s0 + $0x60] sm:$0xff]
  %v42 = vld [vmem:[%s0 + $0x68] sm:$0xff]
  %v43 = vld [vmem:[%s0 + $0x70] sm:$0xff]
  %v44 = vld [vmem:[%s0 + $0x78] sm:$0xff]
  %v45 = vld [vmem:[%s1] sm:$0xff]
  %v46 = vld [vmem:[%s1 + $0x8] sm:$0xff]
  %v47 = vld [vmem:[%s1 + $0x10] sm:$0xff]
  %v48 = vld [vmem:[%s1 + $0x18] sm:$0xff]
  %v49 = vld [vmem:[%s1 + $0x20] sm:$0xff]
  %v50 = vld [vmem:[%s1 + $0x28] sm:$0xff]
  %v51 = vld [vmem:[%s1 + $0x30] sm:$0xff]
  %v52 = vld [vmem:[%s1 + $0x38] sm:$0xff]
  %v53 = vld [vmem:[%s1 + $0x40] sm:$0xff]
  %v54 = vld [vmem:[%s1 + $0x48] sm:$0xff]
  %v55 = vld [vmem:[%s1 + $0x50] sm:$0xff]
  %v56 = vld [vmem:[%s1 + $0x58] sm:$0xff]
  %v57 = vld [vmem:[%s1 + $0x60] sm:$0xff]
  %v58 = vld [vmem:[%s1 + $0x68] sm:$0xff]
  %v59 = vld [vmem:[%s1 + $0x70] sm:$0xff]
  %v60 = vld [vmem:[%s1 + $0x78] sm:$0xff]
  %v62 = vlaneseq
  %v63 = vshrl.u32 %v62, 7
  %v64 = vsub.s32 0, %v63
  %v65 = vrot.slane %v26, %v64
  %67 = vmatprep.subr.mxu0 0.0
  %68 = vmatpush1.msra.mxu0 %v45
  %69 = vmatprep.subr.mxu0 0.0
  %70 = vmatpush1.msra.mxu0 %v46
  %71 = vmatprep.subr.mxu0 0.0
  %72 = vmatpush1.msra.mxu0 %v47
  %73 = vmatprep.subr.mxu0 0.0
  %74 = vmatpush1.msra.mxu0 %v48
  %75 = vmatprep.subr.mxu0 0.0
  %76 = vmatpush1.msra.mxu0 %v49
  %77 = vmatprep.subr.mxu0 0.0
  %78 = vmatpush1.msra.mxu0 %v50
  %79 = vmatprep.subr.mxu0 0.0
  %80 = vmatpush1.msra.mxu0 %v51
  %81 = vmatprep.subr.mxu0 0.0
  %82 = vmatpush1.msra.mxu0 %v52
  %83 = vmatprep.subr.mxu0 0.0
  %84 = vmatpush1.msra.mxu0 %v53
  %85 = vmatprep.subr.mxu0 0.0
  %86 = vmatpush1.msra.mxu0 %v54
  %87 = vmatprep.subr.mxu0 0.0
  %88 = vmatpush1.msra.mxu0 %v55
  %89 = vmatprep.subr.mxu0 0.0
  %90 = vmatpush1.msra.mxu0 %v56
  %91 = vmatprep.subr.mxu0 0.0
  %92 = vmatpush1.msra.mxu0 %v57
  %93 = vmatprep.subr.mxu0 0.0
  %94 = vmatpush1.msra.mxu0 %v58
  %95 = vmatprep.subr.mxu0 0.0
  %96 = vmatpush1.msra.mxu0 %v59
  %97 = vmatprep.subr.mxu0 0.0
  %98 = vmatpush1.msra.mxu0 %v60
  %99 = vmatprep.subr.mxu0 0.0
  %100 = vmatpush1.msra.mxu0 0.0
  %101 = vmatprep.subr.mxu0 0.0
  %102 = vmatpush1.msra.mxu0 0.0
  %103 = vmatprep.subr.mxu0 0.0
  %104 = vmatpush1.msra.mxu0 0.0
  %105 = vmatprep.subr.mxu0 0.0
  %106 = vmatpush1.msra.mxu0 0.0
  %107 = vmatprep.subr.mxu0 0.0
  %108 = vmatpush1.msra.mxu0 0.0
  %109 = vmatprep.subr.mxu0 0.0
  %110 = vmatpush1.msra.mxu0 0.0
  %111 = vmatprep.subr.mxu0 0.0
  %112 = vmatpush1.msra.mxu0 0.0
  %113 = vmatprep.subr.mxu0 0.0
  %114 = vmatpush1.msra.mxu0 0.0
  %115 = vmatprep.subr.mxu0 0.0
  %116 = vmatpush1.msra.mxu0 0.0
  %117 = vmatprep.subr.mxu0 0.0
  %118 = vmatpush1.msra.mxu0 0.0
  %119 = vmatprep.subr.mxu0 0.0
  %120 = vmatpush1.msra.mxu0 0.0
  %121 = vmatprep.subr.mxu0 0.0
  %122 = vmatpush1.msra.mxu0 0.0
  %123 = vmatprep.subr.mxu0 0.0
  %124 = vmatpush1.msra.mxu0 0.0
  %125 = vmatprep.subr.mxu0 0.0
  %126 = vmatpush1.msra.mxu0 0.0
  %127 = vmatprep.subr.mxu0 0.0
  %128 = vmatpush1.msra.mxu0 0.0
  %129 = vmatprep.subr.mxu0 0.0
  %130 = vmatpush1.msra.mxu0 0.0
  %131 = vmatprep.mubr.f32.mxu0 0.0
  %132 = vmatmul.mubr.f32.gmra.mrb[0].mxu0 %v29
  %v133 = vpop.f32.mrb[0].mxu0
  %v134 = vadd.f32 %v65, %v133
  %v135 = vpop.f32.mrb[0].mxu0
  %136 = vmatprep.mubr.f32.mxu0 0.0
  %137 = vmatmul.mubr.f32.gmra.mrb[0].mxu0 %v30
  %v138 = vpop.f32.mrb[0].mxu0
  %v139 = vadd.f32 %v65, %v138
  %v140 = vpop.f32.mrb[0].mxu0
  %141 = vmatprep.mubr.f32.mxu0 0.0
  %142 = vmatmul.mubr.f32.gmra.mrb[0].mxu0 %v31
  %v143 = vpop.f32.mrb[0].mxu0
  %v144 = vadd.f32 %v65, %v143
  %v145 = vpop.f32.mrb[0].mxu0
  %146 = vmatprep.mubr.f32.mxu0 0.0
  %147 = vmatmul.mubr.f32.gmra.mrb[0].mxu0 %v32
  %v148 = vpop.f32.mrb[0].mxu0
  %v149 = vadd.f32 %v65, %v148
  %v150 = vpop.f32.mrb[0].mxu0
  %151 = vmatprep.mubr.f32.mxu0 0.0
  %152 = vmatmul.mubr.f32.gmra.mrb[0].mxu0 %v33
  %v153 = vpop.f32.mrb[0].mxu0
  %v154 = vadd.f32 %v65, %v153
  %v155 = vpop.f32.mrb[0].mxu0
  %156 = vmatprep.mubr.f32.mxu0 0.0
  %157 = vmatmul.mubr.f32.gmra.mrb[0].mxu0 %v34
  %v158 = vpop.f32.mrb[0].mxu0
  %v159 = vadd.f32 %v65, %v158
  %v160 = vpop.f32.mrb[0].mxu0
  %161 = vmatprep.mubr.f32.mxu0 0.0
  %162 = vmatmul.mubr.f32.gmra.mrb[0].mxu0 %v35
  %v163 = vpop.f32.mrb[0].mxu0
  %v164 = vadd.f32 %v65, %v163
  %v165 = vpop.f32.mrb[0].mxu0
  %166 = vmatprep.mubr.f32.mxu0 0.0
  %167 = vmatmul.mubr.f32.gmra.mrb[0].mxu0 %v36
  %v168 = vpop.f32.mrb[0].mxu0
  %v169 = vadd.f32 %v65, %v168
  %v170 = vpop.f32.mrb[0].mxu0
  %171 = vmatprep.mubr.f32.mxu0 0.0
  %172 = vmatmul.mubr.f32.gmra.mrb[0].mxu0 %v37
  %v173 = vpop.f32.mrb[0].mxu0
  %v174 = vadd.f32 %v65, %v173
  %v175 = vpop.f32.mrb[0].mxu0
  %176 = vmatprep.mubr.f32.mxu0 0.0
  %177 = vmatmul.mubr.f32.gmra.mrb[0].mxu0 %v38
  %v178 = vpop.f32.mrb[0].mxu0
  %v179 = vadd.f32 %v65, %v178
  %v180 = vpop.f32.mrb[0].mxu0
  %181 = vmatprep.mubr.f32.mxu0 0.0
  %182 = vmatmul.mubr.f32.gmra.mrb[0].mxu0 %v39
  %v183 = vpop.f32.mrb[0].mxu0
  %v184 = vadd.f32 %v65, %v183
  %v185 = vpop.f32.mrb[0].mxu0
  %186 = vmatprep.mubr.f32.mxu0 0.0
  %187 = vmatmul.mubr.f32.gmra.mrb[0].mxu0 %v40
  %v188 = vpop.f32.mrb[0].mxu0
  %v189 = vadd.f32 %v65, %v188
  %v190 = vpop.f32.mrb[0].mxu0
  %191 = vmatprep.mubr.f32.mxu0 0.0
  %192 = vmatmul.mubr.f32.gmra.mrb[0].mxu0 %v41
  %v193 = vpop.f32.mrb[0].mxu0
  %v194 = vadd.f32 %v65, %v193
  %v195 = vpop.f32.mrb[0].mxu0
  %196 = vmatprep.mubr.f32.mxu0 0.0
  %197 = vmatmul.mubr.f32.gmra.mrb[0].mxu0 %v42
  %v198 = vpop.f32.mrb[0].mxu0
  %v199 = vadd.f32 %v65, %v198
  %v200 = vpop.f32.mrb[0].mxu0
  %201 = vmatprep.mubr.f32.mxu0 0.0
  %202 = vmatmul.mubr.f32.gmra.mrb[0].mxu0 %v43
  %v203 = vpop.f32.mrb[0].mxu0
  %v204 = vadd.f32 %v65, %v203
  %v205 = vpop.f32.mrb[0].mxu0
  %206 = vmatprep.mubr.f32.mxu0 0.0
  %207 = vmatmul.mubr.f32.gmra.mrb[0].mxu0 %v44
  %v208 = vpop.f32.mrb[0].mxu0
  %v209 = vadd.f32 %v65, %v208
  %v210 = vpop.f32.mrb[0].mxu0
  %211 = vdwg.mxu0
  %v212 = vmax.f32 %v134, 0.0
  %v213 = vmax.f32 %v139, 0.0
  %v214 = vmax.f32 %v144, 0.0
  %v215 = vmax.f32 %v149, 0.0
  %v216 = vmax.f32 %v154, 0.0
  %v217 = vmax.f32 %v159, 0.0
  %v218 = vmax.f32 %v164, 0.0
  %v219 = vmax.f32 %v169, 0.0
  %v220 = vmax.f32 %v174, 0.0
  %v221 = vmax.f32 %v179, 0.0
  %v222 = vmax.f32 %v184, 0.0
  %v223 = vmax.f32 %v189, 0.0
  %v224 = vmax.f32 %v194, 0.0
  %v225 = vmax.f32 %v199, 0.0
  %v226 = vmax.f32 %v204, 0.0
  %v227 = vmax.f32 %v209, 0.0
  %v228 = vld [vmem:[%s3] sm:$0xff]
  %v229 = vld [vmem:[%s3 + $0x8] sm:$0xff]
  %v230 = vld [vmem:[%s3 + $0x10] sm:$0xff]
  %v231 = vld [vmem:[%s3 + $0x18] sm:$0xff]
  %v232 = vld [vmem:[%s3 + $0x20] sm:$0xff]
  %v233 = vld [vmem:[%s3 + $0x28] sm:$0xff]
  %v234 = vld [vmem:[%s3 + $0x30] sm:$0xff]
  %v235 = vld [vmem:[%s3 + $0x38] sm:$0xff]
  %v236 = vld [vmem:[%s3 + $0x40] sm:$0xff]
  %v237 = vld [vmem:[%s3 + $0x48] sm:$0xff]
  %v238 = vld [vmem:[%s3 + $0x50] sm:$0xff]
  %v239 = vld [vmem:[%s3 + $0x58] sm:$0xff]
  %v240 = vld [vmem:[%s3 + $0x60] sm:$0xff]
  %v241 = vld [vmem:[%s3 + $0x68] sm:$0xff]
  %v242 = vld [vmem:[%s3 + $0x70] sm:$0xff]
  %v243 = vld [vmem:[%s3 + $0x78] sm:$0xff]
  %v245 = vlaneseq
  %v246 = vshrl.u32 %v245, 7
  %v247 = vsub.s32 0, %v246
  %v248 = vrot.slane %v27, %v247
  %250 = vmatprep.subr.mxu0 0.0
  %251 = vmatpush1.msra.mxu0 %v228
  %252 = vmatprep.subr.mxu0 0.0
  %253 = vmatpush1.msra.mxu0 %v229
  %254 = vmatprep.subr.mxu0 0.0
  %255 = vmatpush1.msra.mxu0 %v230
  %256 = vmatprep.subr.mxu0 0.0
  %257 = vmatpush1.msra.mxu0 %v231
  %258 = vmatprep.subr.mxu0 0.0
  %259 = vmatpush1.msra.mxu0 %v232
  %260 = vmatprep.subr.mxu0 0.0
  %261 = vmatpush1.msra.mxu0 %v233
  %262 = vmatprep.subr.mxu0 0.0
  %263 = vmatpush1.msra.mxu0 %v234
  %264 = vmatprep.subr.mxu0 0.0
  %265 = vmatpush1.msra.mxu0 %v235
  %266 = vmatprep.subr.mxu0 0.0
  %267 = vmatpush1.msra.mxu0 %v236
  %268 = vmatprep.subr.mxu0 0.0
  %269 = vmatpush1.msra.mxu0 %v237
  %270 = vmatprep.subr.mxu0 0.0
  %271 = vmatpush1.msra.mxu0 %v238
  %272 = vmatprep.subr.mxu0 0.0
  %273 = vmatpush1.msra.mxu0 %v239
  %274 = vmatprep.subr.mxu0 0.0
  %275 = vmatpush1.msra.mxu0 %v240
  %276 = vmatprep.subr.mxu0 0.0
  %277 = vmatpush1.msra.mxu0 %v241
  %278 = vmatprep.subr.mxu0 0.0
  %279 = vmatpush1.msra.mxu0 %v242
  %280 = vmatprep.subr.mxu0 0.0
  %281 = vmatpush1.msra.mxu0 %v243
  %282 = vmatprep.subr.mxu0 0.0
  %283 = vmatpush1.msra.mxu0 0.0
  %284 = vmatprep.subr.mxu0 0.0
  %285 = vmatpush1.msra.mxu0 0.0
  %286 = vmatprep.subr.mxu0 0.0
  %287 = vmatpush1.msra.mxu0 0.0
  %288 = vmatprep.subr.mxu0 0.0
  %289 = vmatpush1.msra.mxu0 0.0
  %290 = vmatprep.subr.mxu0 0.0
  %291 = vmatpush1.msra.mxu0 0.0
  %292 = vmatprep.subr.mxu0 0.0
  %293 = vmatpush1.msra.mxu0 0.0
  %294 = vmatprep.subr.mxu0 0.0
  %295 = vmatpush1.msra.mxu0 0.0
  %296 = vmatprep.subr.mxu0 0.0
  %297 = vmatpush1.msra.mxu0 0.0
  %298 = vmatprep.subr.mxu0 0.0
  %299 = vmatpush1.msra.mxu0 0.0
  %300 = vmatprep.subr.mxu0 0.0
  %301 = vmatpush1.msra.mxu0 0.0
  %302 = vmatprep.subr.mxu0 0.0
  %303 = vmatpush1.msra.mxu0 0.0
  %304 = vmatprep.subr.mxu0 0.0
  %305 = vmatpush1.msra.mxu0 0.0
  %306 = vmatprep.subr.mxu0 0.0
  %307 = vmatpush1.msra.mxu0 0.0
  %308 = vmatprep.subr.mxu0 0.0
  %309 = vmatpush1.msra.mxu0 0.0
  %310 = vmatprep.subr.mxu0 0.0
  %311 = vmatpush1.msra.mxu0 0.0
  %312 = vmatprep.subr.mxu0 0.0
  %313 = vmatpush1.msra.mxu0 0.0
  %314 = vmatprep.mubr.f32.mxu0 0.0
  %315 = vmatmul.mubr.f32.gmra.mrb[0].mxu0 %v212
  %v316 = vpop.f32.mrb[0].mxu0
  %v317 = vadd.f32 %v248, %v316
  %v318 = vpop.f32.mrb[0].mxu0
  %319 = vmatprep.mubr.f32.mxu0 0.0
  %320 = vmatmul.mubr.f32.gmra.mrb[0].mxu0 %v213
  %v321 = vpop.f32.mrb[0].mxu0
  %v322 = vadd.f32 %v248, %v321
  %v323 = vpop.f32.mrb[0].mxu0
  %324 = vmatprep.mubr.f32.mxu0 0.0
  %325 = vmatmul.mubr.f32.gmra.mrb[0].mxu0 %v214
  %v326 = vpop.f32.mrb[0].mxu0
  %v327 = vadd.f32 %v248, %v326
  %v328 = vpop.f32.mrb[0].mxu0
  %329 = vmatprep.mubr.f32.mxu0 0.0
  %330 = vmatmul.mubr.f32.gmra.mrb[0].mxu0 %v215
  %v331 = vpop.f32.mrb[0].mxu0
  %v332 = vadd.f32 %v248, %v331
  %v333 = vpop.f32.mrb[0].mxu0
  %334 = vmatprep.mubr.f32.mxu0 0.0
  %335 = vmatmul.mubr.f32.gmra.mrb[0].mxu0 %v216
  %v336 = vpop.f32.mrb[0].mxu0
  %v337 = vadd.f32 %v248, %v336
  %v338 = vpop.f32.mrb[0].mxu0
  %339 = vmatprep.mubr.f32.mxu0 0.0
  %340 = vmatmul.mubr.f32.gmra.mrb[0].mxu0 %v217
  %v341 = vpop.f32.mrb[0].mxu0
  %v342 = vadd.f32 %v248, %v341
  %v343 = vpop.f32.mrb[0].mxu0
  %344 = vmatprep.mubr.f32.mxu0 0.0
  %345 = vmatmul.mubr.f32.gmra.mrb[0].mxu0 %v218
  %v346 = vpop.f32.mrb[0].mxu0
  %v347 = vadd.f32 %v248, %v346
  %v348 = vpop.f32.mrb[0].mxu0
  %349 = vmatprep.mubr.f32.mxu0 0.0
  %350 = vmatmul.mubr.f32.gmra.mrb[0].mxu0 %v219
  %v351 = vpop.f32.mrb[0].mxu0
  %v352 = vadd.f32 %v248, %v351
  %v353 = vpop.f32.mrb[0].mxu0
  %354 = vmatprep.mubr.f32.mxu0 0.0
  %355 = vmatmul.mubr.f32.gmra.mrb[0].mxu0 %v220
  %v356 = vpop.f32.mrb[0].mxu0
  %v357 = vadd.f32 %v248, %v356
  %v358 = vpop.f32.mrb[0].mxu0
  %359 = vmatprep.mubr.f32.mxu0 0.0
  %360 = vmatmul.mubr.f32.gmra.mrb[0].mxu0 %v221
  %v361 = vpop.f32.mrb[0].mxu0
  %v362 = vadd.f32 %v248, %v361
  %v363 = vpop.f32.mrb[0].mxu0
  %364 = vmatprep.mubr.f32.mxu0 0.0
  %365 = vmatmul.mubr.f32.gmra.mrb[0].mxu0 %v222
  %v366 = vpop.f32.mrb[0].mxu0
  %v367 = vadd.f32 %v248, %v366
  %v368 = vpop.f32.mrb[0].mxu0
  %369 = vmatprep.mubr.f32.mxu0 0.0
  %370 = vmatmul.mubr.f32.gmra.mrb[0].mxu0 %v223
  %v371 = vpop.f32.mrb[0].mxu0
  %v372 = vadd.f32 %v248, %v371
  %v373 = vpop.f32.mrb[0].mxu0
  %374 = vmatprep.mubr.f32.mxu0 0.0
  %375 = vmatmul.mubr.f32.gmra.mrb[0].mxu0 %v224
  %v376 = vpop.f32.mrb[0].mxu0
  %v377 = vadd.f32 %v248, %v376
  %v378 = vpop.f32.mrb[0].mxu0
  %379 = vmatprep.mubr.f32.mxu0 0.0
  %380 = vmatmul.mubr.f32.gmra.mrb[0].mxu0 %v225
  %v381 = vpop.f32.mrb[0].mxu0
  %v382 = vadd.f32 %v248, %v381
  %v383 = vpop.f32.mrb[0].mxu0
  %384 = vmatprep.mubr.f32.mxu0 0.0
  %385 = vmatmul.mubr.f32.gmra.mrb[0].mxu0 %v226
  %v386 = vpop.f32.mrb[0].mxu0
  %v387 = vadd.f32 %v248, %v386
  %v388 = vpop.f32.mrb[0].mxu0
  %389 = vmatprep.mubr.f32.mxu0 0.0
  %390 = vmatmul.mubr.f32.gmra.mrb[0].mxu0 %v227
  %v391 = vpop.f32.mrb[0].mxu0
  %v392 = vadd.f32 %v248, %v391
  %v393 = vpop.f32.mrb[0].mxu0
  %394 = vdwg.mxu0
  %v395 = vmax.f32 %v317, 0.0
  %v396 = vmax.f32 %v322, 0.0
  %v397 = vmax.f32 %v327, 0.0
  %v398 = vmax.f32 %v332, 0.0
  %v399 = vmax.f32 %v337, 0.0
  %v400 = vmax.f32 %v342, 0.0
  %v401 = vmax.f32 %v347, 0.0
  %v402 = vmax.f32 %v352, 0.0
  %v403 = vmax.f32 %v357, 0.0
  %v404 = vmax.f32 %v362, 0.0
  %v405 = vmax.f32 %v367, 0.0
  %v406 = vmax.f32 %v372, 0.0
  %v407 = vmax.f32 %v377, 0.0
  %v408 = vmax.f32 %v382, 0.0
  %v409 = vmax.f32 %v387, 0.0
  %v410 = vmax.f32 %v392, 0.0
  %v411 = vld [vmem:[%s5] sm:$0xff]
  %v412 = vld [vmem:[%s5 + $0x8] sm:$0xff]
  %v413 = vld [vmem:[%s5 + $0x10] sm:$0xff]
  %v414 = vld [vmem:[%s5 + $0x18] sm:$0xff]
  %v415 = vld [vmem:[%s5 + $0x20] sm:$0xff]
  %v416 = vld [vmem:[%s5 + $0x28] sm:$0xff]
  %v417 = vld [vmem:[%s5 + $0x30] sm:$0xff]
  %v418 = vld [vmem:[%s5 + $0x38] sm:$0xff]
  %v419 = vld [vmem:[%s5 + $0x40] sm:$0xff]
  %v420 = vld [vmem:[%s5 + $0x48] sm:$0xff]
  %v421 = vld [vmem:[%s5 + $0x50] sm:$0xff]
  %v422 = vld [vmem:[%s5 + $0x58] sm:$0xff]
  %v423 = vld [vmem:[%s5 + $0x60] sm:$0xff]
  %v424 = vld [vmem:[%s5 + $0x68] sm:$0xff]
  %v425 = vld [vmem:[%s5 + $0x70] sm:$0xff]
  %v426 = vld [vmem:[%s5 + $0x78] sm:$0xff]
  %v428 = vlaneseq
  %v429 = vshrl.u32 %v428, 7
  %v430 = vsub.s32 0, %v429
  %v431 = vrot.slane %v28, %v430
  %433 = vmatprep.subr.mxu0 0.0
  %434 = vmatpush1.msra.mxu0 %v411
  %435 = vmatprep.subr.mxu0 0.0
  %436 = vmatpush1.msra.mxu0 %v412
  %437 = vmatprep.subr.mxu0 0.0
  %438 = vmatpush1.msra.mxu0 %v413
  %439 = vmatprep.subr.mxu0 0.0
  %440 = vmatpush1.msra.mxu0 %v414
  %441 = vmatprep.subr.mxu0 0.0
  %442 = vmatpush1.msra.mxu0 %v415
  %443 = vmatprep.subr.mxu0 0.0
  %444 = vmatpush1.msra.mxu0 %v416
  %445 = vmatprep.subr.mxu0 0.0
  %446 = vmatpush1.msra.mxu0 %v417
  %447 = vmatprep.subr.mxu0 0.0
  %448 = vmatpush1.msra.mxu0 %v418
  %449 = vmatprep.subr.mxu0 0.0
  %450 = vmatpush1.msra.mxu0 %v419
  %451 = vmatprep.subr.mxu0 0.0
  %452 = vmatpush1.msra.mxu0 %v420
  %453 = vmatprep.subr.mxu0 0.0
  %454 = vmatpush1.msra.mxu0 %v421
  %455 = vmatprep.subr.mxu0 0.0
  %456 = vmatpush1.msra.mxu0 %v422
  %457 = vmatprep.subr.mxu0 0.0
  %458 = vmatpush1.msra.mxu0 %v423
  %459 = vmatprep.subr.mxu0 0.0
  %460 = vmatpush1.msra.mxu0 %v424
  %461 = vmatprep.subr.mxu0 0.0
  %462 = vmatpush1.msra.mxu0 %v425
  %463 = vmatprep.subr.mxu0 0.0
  %464 = vmatpush1.msra.mxu0 %v426
  %465 = vmatprep.subr.mxu0 0.0
  %466 = vmatpush1.msra.mxu0 0.0
  %467 = vmatprep.subr.mxu0 0.0
  %468 = vmatpush1.msra.mxu0 0.0
  %469 = vmatprep.subr.mxu0 0.0
  %470 = vmatpush1.msra.mxu0 0.0
  %471 = vmatprep.subr.mxu0 0.0
  %472 = vmatpush1.msra.mxu0 0.0
  %473 = vmatprep.subr.mxu0 0.0
  %474 = vmatpush1.msra.mxu0 0.0
  %475 = vmatprep.subr.mxu0 0.0
  %476 = vmatpush1.msra.mxu0 0.0
  %477 = vmatprep.subr.mxu0 0.0
  %478 = vmatpush1.msra.mxu0 0.0
  %479 = vmatprep.subr.mxu0 0.0
  %480 = vmatpush1.msra.mxu0 0.0
  %481 = vmatprep.subr.mxu0 0.0
  %482 = vmatpush1.msra.mxu0 0.0
  %483 = vmatprep.subr.mxu0 0.0
  %484 = vmatpush1.msra.mxu0 0.0
  %485 = vmatprep.subr.mxu0 0.0
  %486 = vmatpush1.msra.mxu0 0.0
  %487 = vmatprep.subr.mxu0 0.0
  %488 = vmatpush1.msra.mxu0 0.0
  %489 = vmatprep.subr.mxu0 0.0
  %490 = vmatpush1.msra.mxu0 0.0
  %491 = vmatprep.subr.mxu0 0.0
  %492 = vmatpush1.msra.mxu0 0.0
  %493 = vmatprep.subr.mxu0 0.0
  %494 = vmatpush1.msra.mxu0 0.0
  %495 = vmatprep.subr.mxu0 0.0
  %496 = vmatpush1.msra.mxu0 0.0
  %497 = vmatprep.mubr.f32.mxu0 0.0
  %498 = vmatmul.mubr.f32.gmra.mrb[0].mxu0 %v395
  %v499 = vpop.f32.mrb[0].mxu0
  %v500 = vadd.f32 %v431, %v499
  %v501 = vpop.f32.mrb[0].mxu0
  %502 = vmatprep.mubr.f32.mxu0 0.0
  %503 = vmatmul.mubr.f32.gmra.mrb[0].mxu0 %v396
  %v504 = vpop.f32.mrb[0].mxu0
  %v505 = vadd.f32 %v431, %v504
  %v506 = vpop.f32.mrb[0].mxu0
  %507 = vmatprep.mubr.f32.mxu0 0.0
  %508 = vmatmul.mubr.f32.gmra.mrb[0].mxu0 %v397
  %v509 = vpop.f32.mrb[0].mxu0
  %v510 = vadd.f32 %v431, %v509
  %v511 = vpop.f32.mrb[0].mxu0
  %512 = vmatprep.mubr.f32.mxu0 0.0
  %513 = vmatmul.mubr.f32.gmra.mrb[0].mxu0 %v398
  %v514 = vpop.f32.mrb[0].mxu0
  %v515 = vadd.f32 %v431, %v514
  %v516 = vpop.f32.mrb[0].mxu0
  %517 = vmatprep.mubr.f32.mxu0 0.0
  %518 = vmatmul.mubr.f32.gmra.mrb[0].mxu0 %v399
  %v519 = vpop.f32.mrb[0].mxu0
  %v520 = vadd.f32 %v431, %v519
  %v521 = vpop.f32.mrb[0].mxu0
  %522 = vmatprep.mubr.f32.mxu0 0.0
  %523 = vmatmul.mubr.f32.gmra.mrb[0].mxu0 %v400
  %v524 = vpop.f32.mrb[0].mxu0
  %v525 = vadd.f32 %v431, %v524
  %v526 = vpop.f32.mrb[0].mxu0
  %527 = vmatprep.mubr.f32.mxu0 0.0
  %528 = vmatmul.mubr.f32.gmra.mrb[0].mxu0 %v401
  %v529 = vpop.f32.mrb[0].mxu0
  %v530 = vadd.f32 %v431, %v529
  %v531 = vpop.f32.mrb[0].mxu0
  %532 = vmatprep.mubr.f32.mxu0 0.0
  %533 = vmatmul.mubr.f32.gmra.mrb[0].mxu0 %v402
  %v534 = vpop.f32.mrb[0].mxu0
  %v535 = vadd.f32 %v431, %v534
  %v536 = vpop.f32.mrb[0].mxu0
  %537 = vmatprep.mubr.f32.mxu0 0.0
  %538 = vmatmul.mubr.f32.gmra.mrb[0].mxu0 %v403
  %v539 = vpop.f32.mrb[0].mxu0
  %v540 = vadd.f32 %v431, %v539
  %v541 = vpop.f32.mrb[0].mxu0
  %542 = vmatprep.mubr.f32.mxu0 0.0
  %543 = vmatmul.mubr.f32.gmra.mrb[0].mxu0 %v404
  %v544 = vpop.f32.mrb[0].mxu0
  %v545 = vadd.f32 %v431, %v544
  %v546 = vpop.f32.mrb[0].mxu0
  %547 = vmatprep.mubr.f32.mxu0 0.0
  %548 = vmatmul.mubr.f32.gmra.mrb[0].mxu0 %v405
  %v549 = vpop.f32.mrb[0].mxu0
  %v550 = vadd.f32 %v431, %v549
  %v551 = vpop.f32.mrb[0].mxu0
  %552 = vmatprep.mubr.f32.mxu0 0.0
  %553 = vmatmul.mubr.f32.gmra.mrb[0].mxu0 %v406
  %v554 = vpop.f32.mrb[0].mxu0
  %v555 = vadd.f32 %v431, %v554
  %v556 = vpop.f32.mrb[0].mxu0
  %557 = vmatprep.mubr.f32.mxu0 0.0
  %558 = vmatmul.mubr.f32.gmra.mrb[0].mxu0 %v407
  %v559 = vpop.f32.mrb[0].mxu0
  %v560 = vadd.f32 %v431, %v559
  %v561 = vpop.f32.mrb[0].mxu0
  %562 = vmatprep.mubr.f32.mxu0 0.0
  %563 = vmatmul.mubr.f32.gmra.mrb[0].mxu0 %v408
  %v564 = vpop.f32.mrb[0].mxu0
  %v565 = vadd.f32 %v431, %v564
  %v566 = vpop.f32.mrb[0].mxu0
  %567 = vmatprep.mubr.f32.mxu0 0.0
  %568 = vmatmul.mubr.f32.gmra.mrb[0].mxu0 %v409
  %v569 = vpop.f32.mrb[0].mxu0
  %v570 = vadd.f32 %v431, %v569
  %v571 = vpop.f32.mrb[0].mxu0
  %572 = vmatprep.mubr.f32.mxu0 0.0
  %573 = vmatmul.mubr.f32.gmra.mrb[0].mxu0 %v410
  %v574 = vpop.f32.mrb[0].mxu0
  %v575 = vadd.f32 %v431, %v574
  %v576 = vpop.f32.mrb[0].mxu0
  %577 = vdwg.mxu0
  %v578 = vmax.f32 %v500, 0.0
  %v579 = vmax.f32 %v505, 0.0
  %v580 = vmax.f32 %v510, 0.0
  %v581 = vmax.f32 %v515, 0.0
  %v582 = vmax.f32 %v520, 0.0
  %v583 = vmax.f32 %v525, 0.0
  %v584 = vmax.f32 %v530, 0.0
  %v585 = vmax.f32 %v535, 0.0
  %v586 = vmax.f32 %v540, 0.0
  %v587 = vmax.f32 %v545, 0.0
  %v588 = vmax.f32 %v550, 0.0
  %v589 = vmax.f32 %v555, 0.0
  %v590 = vmax.f32 %v560, 0.0
  %v591 = vmax.f32 %v565, 0.0
  %v592 = vmax.f32 %v570, 0.0
  %v593 = vmax.f32 %v575, 0.0
  %594 = vst [vmem:[%s7] sm:$0xff] %v578
  %595 = vst [vmem:[%s7 + $0x8] sm:$0xff] %v579
  %596 = vst [vmem:[%s7 + $0x10] sm:$0xff] %v580
  %597 = vst [vmem:[%s7 + $0x18] sm:$0xff] %v581
  %598 = vst [vmem:[%s7 + $0x20] sm:$0xff] %v582
  %599 = vst [vmem:[%s7 + $0x28] sm:$0xff] %v583
  %600 = vst [vmem:[%s7 + $0x30] sm:$0xff] %v584
  %601 = vst [vmem:[%s7 + $0x38] sm:$0xff] %v585
  %602 = vst [vmem:[%s7 + $0x40] sm:$0xff] %v586
  %603 = vst [vmem:[%s7 + $0x48] sm:$0xff] %v587
  %604 = vst [vmem:[%s7 + $0x50] sm:$0xff] %v588
  %605 = vst [vmem:[%s7 + $0x58] sm:$0xff] %v589
  %606 = vst [vmem:[%s7 + $0x60] sm:$0xff] %v590
  %607 = vst [vmem:[%s7 + $0x68] sm:$0xff] %v591
  %608 = vst [vmem:[%s7 + $0x70] sm:$0xff] %v592
  %609 = vst [vmem:[%s7 + $0x78] sm:$0xff] %v593
  // Predicated region
  $region30: #{nin_block_forward.1} parent=0 // pred_check
    _
  $region31: #{nin_block_forward.1} parent=0 // pred_check_branch
    %611 = sbr.rel (0) target = $region33
  $region32: #{nin_block_forward.1} parent=0 // pred_region
    _
  $region33: #{nin_block_forward.1} parent=0 // pred_fallthru
    _
  // Predicated region
  $region34: #{nin_block_forward.1} parent=0 // pred_check
    _
  $region35: #{nin_block_forward.1} parent=0 // pred_check_branch
    %613 = sbr.rel (0) target = $region37
  $region36: #{nin_block_forward.1} parent=0 // pred_region
    _
  $region37: #{nin_block_forward.1} parent=0 // pred_fallthru
    _

</llo_original>
